<compile_context>
chip_gen: v7x
topology: tpu7x:2x2x1
jax: 0.10.0
libtpu: 0.0.40
codegen_flags: <defaults>
</compile_context>

<pallas_src>
import functools

import jax
import jax.numpy as jnp
from jax.experimental import pallas as pl
from jax.experimental.pallas import tpu as pltpu


def _hyper_embed_kernel(z_ref, w1_ref, b1_ref, w2_ref, b2_ref, o_ref, hst_ref):
    """Fused two-layer hypernetwork over all N latent vectors, one invocation.

    z_ref  : (N, z_dim)                 all latent vectors
    w1_ref : (z_dim, in_size*z_dim)     first-layer weight (original layout)
    b1_ref : (1, in_size*z_dim)         first-layer bias
    w2_ref : (z_dim, outf)              second-layer weight
    b2_ref : (1, outf)                  second-layer bias
    o_ref  : (in_size*N, outf)          row r = i*N + n  ==  h_final row i of z_n
    hst_ref: (in_size*N, z_dim)         VMEM scratch holding the restacked h_in
    """
    n, z_dim = z_ref.shape
    in_size = hst_ref.shape[0] // n

    # Stage 1: one batched MXU matmul for the first layer over all N z's.
    h = jnp.dot(z_ref[...], w1_ref[...],
                preferred_element_type=jnp.float32) + b1_ref[...]   # (N, in_size*z_dim)

    # Restack (N, in_size*z_dim) -> (in_size*N, z_dim) with static slice copies
    # so the second layer runs as a single batched-M matmul on the MXU.
    for i in range(in_size):
        hst_ref[i * n:(i + 1) * n, :] = h[:, i * z_dim:(i + 1) * z_dim]

    # Stage 2: one batched MXU matmul (M = in_size*N) for the second layer.
    o = jnp.dot(hst_ref[...], w2_ref[...],
                preferred_element_type=jnp.float32) + b2_ref[...]   # (in_size*N, outf)
    o_ref[...] = o.astype(o_ref.dtype)


def hypernet_apply_pallas(zs, w1, b1, w2, b2, *, z_dim, in_size, out_size, f_size):
    """Runs the two-layer hypernetwork on all N latent vectors in one kernel.

    zs : (N, z_dim)
    w1 : (z_dim, in_size*z_dim),  b1 : (in_size*z_dim,)
    w2 : (z_dim, out_size*f*f),   b2 : (out_size*f*f,)
    returns (in_size*N, outf) with row r = i*N + n == h_final row i for z_n.
    """
    N = zs.shape[0]
    outf = out_size * f_size * f_size

    # Plain-JAX glue: make the biases 2-D so broadcasting in-kernel is trivial.
    b1r = b1.reshape(1, in_size * z_dim)
    b2r = b2.reshape(1, outf)

    # Whole-array blocks, fully VMEM-resident; no grid -> single invocation.
    vmem_specs = [pl.BlockSpec(memory_space=pltpu.MemorySpace.VMEM)
                  for _ in range(5)]

    return pl.pallas_call(
        _hyper_embed_kernel,
        out_shape=jax.ShapeDtypeStruct((in_size * N, outf), jnp.float32),
        in_specs=vmem_specs,
        out_specs=pl.BlockSpec(memory_space=pltpu.MemorySpace.VMEM),
        scratch_shapes=[pltpu.VMEM((in_size * N, z_dim), jnp.float32)],
    )(zs, w1, b1r, w2, b2r)


def embedding_forward(zs, w1, b1, w2, b2, *, z_dim, in_size, out_size, f_size,
                      in_unit, out_unit):
    """Replicates Embedding.forward(hyper_net) — returns OIHW conv kernel."""
    N = in_unit * out_unit
    outf = out_size * f_size * f_size

    # Hot path (both matmuls) inside the single Pallas kernel invocation.
    hfin = hypernet_apply_pallas(zs, w1, b1, w2, b2, z_dim=z_dim,
                                 in_size=in_size, out_size=out_size,
                                 f_size=f_size)                     # (in_size*N, outf)

    # Vectorized equivalent of the per-z torch .view + the two torch.cat calls.
    # per_z[n, i, :] == h_final row i of z_n
    per_z = hfin.reshape(in_size, N, outf).transpose(1, 0, 2)       # (N, in_size, outf)
    # Per-z flat reinterpretation to (out_size, in_size, f, f), then the two cats.
    kern = per_z.reshape(out_unit, in_unit, out_size, in_size, f_size, f_size)
    kern = kern.transpose(0, 2, 1, 3, 4, 5)                         # (ou, O, iu, I, f, f)
    return kern.reshape(out_unit * out_size, in_unit * in_size, f_size, f_size)


def embedding_forward_reference(zs, w1, b1, w2, b2, *, in_size, out_size, f_size,
                                in_unit, out_unit):
    """Pure-JAX reference replicating the PyTorch semantics."""
    rows = []
    for i in range(out_unit):
        cols = []
        for j in range(in_unit):
            z = zs[i * in_unit + j]
            h_in = (z @ w1 + b1).reshape(in_size, -1)
            h_final = h_in @ w2 + b2
            cols.append(h_final.reshape(out_size, in_size, f_size, f_size))
        rows.append(jnp.concatenate(cols, axis=1))
    return jnp.concatenate(rows, axis=0)


if __name__ == "__main__":
    # Small, deterministic configuration.
    z_dim, f_size, in_size, out_size = 64, 3, 16, 16
    in_unit, out_unit = 2, 2                 # scale_factor = [2, 2]
    N = in_unit * out_unit

    key = jax.random.PRNGKey(0)
    k1, k2, k3, k4, k5 = jax.random.split(key, 5)

    # Embedding parameters: z_list ~ randn(z_dim) each.
    zs = jax.random.normal(k1, (N, z_dim), jnp.float32)

    # HyperNetwork parameters: torch.fmod(randn, 2) initialization.
    w1 = jnp.fmod(jax.random.normal(k2, (z_dim, in_size * z_dim), jnp.float32), 2.0)
    b1 = jnp.fmod(jax.random.normal(k3, (in_size * z_dim,), jnp.float32), 2.0)
    w2 = jnp.fmod(jax.random.normal(k4, (z_dim, out_size * f_size * f_size), jnp.float32), 2.0)
    b2 = jnp.fmod(jax.random.normal(k5, (out_size * f_size * f_size,), jnp.float32), 2.0)

    fwd = jax.jit(functools.partial(
        embedding_forward, z_dim=z_dim, in_size=in_size, out_size=out_size,
        f_size=f_size, in_unit=in_unit, out_unit=out_unit))

    out = jax.block_until_ready(fwd(zs, w1, b1, w2, b2))

    ref = embedding_forward_reference(zs, w1, b1, w2, b2, in_size=in_size,
                                      out_size=out_size, f_size=f_size,
                                      in_unit=in_unit, out_unit=out_unit)

    assert out.shape == (out_unit * out_size, in_unit * in_size, f_size, f_size), out.shape
    assert jnp.allclose(out, ref, atol=1e-4, rtol=1e-4), "mismatch vs reference"
    print("KERNEL_OK")
</pallas_src>

<mosaic_0001>
module attributes {stable_mosaic.version = 11 : i64} {
  func.func @_hyper_embed_kernel(%arg0: memref<4x64xf32, #tpu.memory_space<vmem>>, %arg1: memref<64x1024xf32, #tpu.memory_space<vmem>>, %arg2: memref<1x1024xf32, #tpu.memory_space<vmem>>, %arg3: memref<64x144xf32, #tpu.memory_space<vmem>>, %arg4: memref<1x144xf32, #tpu.memory_space<vmem>>, %arg5: memref<64x144xf32, #tpu.memory_space<vmem>>, %arg6: memref<64x64xf32, #tpu.memory_space<vmem>>) attributes {dimension_semantics = [], scalar_prefetch = 0 : i64, scratch_operands = 1 : i64, tpu.core_type = #tpu.core_type<tc>} {
    %c0 = arith.constant 0 : index
    %c0_0 = arith.constant 0 : index
    %0 = vector.load %arg0[%c0, %c0_0] : memref<4x64xf32, #tpu.memory_space<vmem>>, vector<4x64xf32>
    %c0_1 = arith.constant 0 : index
    %c0_2 = arith.constant 0 : index
    %1 = vector.load %arg1[%c0_1, %c0_2] : memref<64x1024xf32, #tpu.memory_space<vmem>>, vector<64x1024xf32>
    %cst = arith.constant dense<0.000000e+00> : vector<4x1024xf32>
    %2 = tpu.matmul %0, %1, %cst {dimension_numbers = #tpu.dot_dimension_numbers<[1], [0], [0], [1], [0, 0, 1, 1], [], []>} : vector<4x64xf32>, vector<64x1024xf32>, vector<4x1024xf32> -> vector<4x1024xf32>
    %c0_3 = arith.constant 0 : index
    %c0_4 = arith.constant 0 : index
    %3 = vector.load %arg2[%c0_3, %c0_4] : memref<1x1024xf32, #tpu.memory_space<vmem>>, vector<1x1024xf32>
    %4 = vector.broadcast %3 : vector<1x1024xf32> to vector<4x1024xf32>
    %5 = arith.addf %2, %4 : vector<4x1024xf32>
    %6 = vector.extract_strided_slice %5 {offsets = [0, 0], sizes = [4, 64], strides = [1, 1]} : vector<4x1024xf32> to vector<4x64xf32>
    %c0_5 = arith.constant 0 : index
    %c0_6 = arith.constant 0 : index
    %7 = vector.load %arg6[%c0_5, %c0_6] : memref<64x64xf32, #tpu.memory_space<vmem>>, vector<4x64xf32>
    tpu.vector_store %arg6[%c0_5, %c0_6], %6 {strides = array<i32>} : memref<64x64xf32, #tpu.memory_space<vmem>>, vector<4x64xf32>,
    %8 = vector.extract_strided_slice %5 {offsets = [0, 64], sizes = [4, 64], strides = [1, 1]} : vector<4x1024xf32> to vector<4x64xf32>
    %c4 = arith.constant 4 : index
    %c0_7 = arith.constant 0 : index
    %9 = vector.load %arg6[%c4, %c0_7] : memref<64x64xf32, #tpu.memory_space<vmem>>, vector<4x64xf32>
    tpu.vector_store %arg6[%c4, %c0_7], %8 {strides = array<i32>} : memref<64x64xf32, #tpu.memory_space<vmem>>, vector<4x64xf32>,
    %10 = vector.extract_strided_slice %5 {offsets = [0, 128], sizes = [4, 64], strides = [1, 1]} : vector<4x1024xf32> to vector<4x64xf32>
    %c8 = arith.constant 8 : index
    %c0_8 = arith.constant 0 : index
    %11 = vector.load %arg6[%c8, %c0_8] : memref<64x64xf32, #tpu.memory_space<vmem>>, vector<4x64xf32>
    tpu.vector_store %arg6[%c8, %c0_8], %10 {strides = array<i32>} : memref<64x64xf32, #tpu.memory_space<vmem>>, vector<4x64xf32>,
    %12 = vector.extract_strided_slice %5 {offsets = [0, 192], sizes = [4, 64], strides = [1, 1]} : vector<4x1024xf32> to vector<4x64xf32>
    %c12 = arith.constant 12 : index
    %c0_9 = arith.constant 0 : index
    %13 = vector.load %arg6[%c12, %c0_9] : memref<64x64xf32, #tpu.memory_space<vmem>>, vector<4x64xf32>
    tpu.vector_store %arg6[%c12, %c0_9], %12 {strides = array<i32>} : memref<64x64xf32, #tpu.memory_space<vmem>>, vector<4x64xf32>,
    %14 = vector.extract_strided_slice %5 {offsets = [0, 256], sizes = [4, 64], strides = [1, 1]} : vector<4x1024xf32> to vector<4x64xf32>
    %c16 = arith.constant 16 : index
    %c0_10 = arith.constant 0 : index
    %15 = vector.load %arg6[%c16, %c0_10] : memref<64x64xf32, #tpu.memory_space<vmem>>, vector<4x64xf32>
    tpu.vector_store %arg6[%c16, %c0_10], %14 {strides = array<i32>} : memref<64x64xf32, #tpu.memory_space<vmem>>, vector<4x64xf32>,
    %16 = vector.extract_strided_slice %5 {offsets = [0, 320], sizes = [4, 64], strides = [1, 1]} : vector<4x1024xf32> to vector<4x64xf32>
    %c20 = arith.constant 20 : index
    %c0_11 = arith.constant 0 : index
    %17 = vector.load %arg6[%c20, %c0_11] : memref<64x64xf32, #tpu.memory_space<vmem>>, vector<4x64xf32>
    tpu.vector_store %arg6[%c20, %c0_11], %16 {strides = array<i32>} : memref<64x64xf32, #tpu.memory_space<vmem>>, vector<4x64xf32>,
    %18 = vector.extract_strided_slice %5 {offsets = [0, 384], sizes = [4, 64], strides = [1, 1]} : vector<4x1024xf32> to vector<4x64xf32>
    %c24 = arith.constant 24 : index
    %c0_12 = arith.constant 0 : index
    %19 = vector.load %arg6[%c24, %c0_12] : memref<64x64xf32, #tpu.memory_space<vmem>>, vector<4x64xf32>
    tpu.vector_store %arg6[%c24, %c0_12], %18 {strides = array<i32>} : memref<64x64xf32, #tpu.memory_space<vmem>>, vector<4x64xf32>,
    %20 = vector.extract_strided_slice %5 {offsets = [0, 448], sizes = [4, 64], strides = [1, 1]} : vector<4x1024xf32> to vector<4x64xf32>
    %c28 = arith.constant 28 : index
    %c0_13 = arith.constant 0 : index
    %21 = vector.load %arg6[%c28, %c0_13] : memref<64x64xf32, #tpu.memory_space<vmem>>, vector<4x64xf32>
    tpu.vector_store %arg6[%c28, %c0_13], %20 {strides = array<i32>} : memref<64x64xf32, #tpu.memory_space<vmem>>, vector<4x64xf32>,
    %22 = vector.extract_strided_slice %5 {offsets = [0, 512], sizes = [4, 64], strides = [1, 1]} : vector<4x1024xf32> to vector<4x64xf32>
    %c32 = arith.constant 32 : index
    %c0_14 = arith.constant 0 : index
    %23 = vector.load %arg6[%c32, %c0_14] : memref<64x64xf32, #tpu.memory_space<vmem>>, vector<4x64xf32>
    tpu.vector_store %arg6[%c32, %c0_14], %22 {strides = array<i32>} : memref<64x64xf32, #tpu.memory_space<vmem>>, vector<4x64xf32>,
    %24 = vector.extract_strided_slice %5 {offsets = [0, 576], sizes = [4, 64], strides = [1, 1]} : vector<4x1024xf32> to vector<4x64xf32>
    %c36 = arith.constant 36 : index
    %c0_15 = arith.constant 0 : index
    %25 = vector.load %arg6[%c36, %c0_15] : memref<64x64xf32, #tpu.memory_space<vmem>>, vector<4x64xf32>
    tpu.vector_store %arg6[%c36, %c0_15], %24 {strides = array<i32>} : memref<64x64xf32, #tpu.memory_space<vmem>>, vector<4x64xf32>,
    %26 = vector.extract_strided_slice %5 {offsets = [0, 640], sizes = [4, 64], strides = [1, 1]} : vector<4x1024xf32> to vector<4x64xf32>
    %c40 = arith.constant 40 : index
    %c0_16 = arith.constant 0 : index
    %27 = vector.load %arg6[%c40, %c0_16] : memref<64x64xf32, #tpu.memory_space<vmem>>, vector<4x64xf32>
    tpu.vector_store %arg6[%c40, %c0_16], %26 {strides = array<i32>} : memref<64x64xf32, #tpu.memory_space<vmem>>, vector<4x64xf32>,
    %28 = vector.extract_strided_slice %5 {offsets = [0, 704], sizes = [4, 64], strides = [1, 1]} : vector<4x1024xf32> to vector<4x64xf32>
    %c44 = arith.constant 44 : index
    %c0_17 = arith.constant 0 : index
    %29 = vector.load %arg6[%c44, %c0_17] : memref<64x64xf32, #tpu.memory_space<vmem>>, vector<4x64xf32>
    tpu.vector_store %arg6[%c44, %c0_17], %28 {strides = array<i32>} : memref<64x64xf32, #tpu.memory_space<vmem>>, vector<4x64xf32>,
    %30 = vector.extract_strided_slice %5 {offsets = [0, 768], sizes = [4, 64], strides = [1, 1]} : vector<4x1024xf32> to vector<4x64xf32>
    %c48 = arith.constant 48 : index
    %c0_18 = arith.constant 0 : index
    %31 = vector.load %arg6[%c48, %c0_18] : memref<64x64xf32, #tpu.memory_space<vmem>>, vector<4x64xf32>
    tpu.vector_store %arg6[%c48, %c0_18], %30 {strides = array<i32>} : memref<64x64xf32, #tpu.memory_space<vmem>>, vector<4x64xf32>,
    %32 = vector.extract_strided_slice %5 {offsets = [0, 832], sizes = [4, 64], strides = [1, 1]} : vector<4x1024xf32> to vector<4x64xf32>
    %c52 = arith.constant 52 : index
    %c0_19 = arith.constant 0 : index
    %33 = vector.load %arg6[%c52, %c0_19] : memref<64x64xf32, #tpu.memory_space<vmem>>, vector<4x64xf32>
    tpu.vector_store %arg6[%c52, %c0_19], %32 {strides = array<i32>} : memref<64x64xf32, #tpu.memory_space<vmem>>, vector<4x64xf32>,
    %34 = vector.extract_strided_slice %5 {offsets = [0, 896], sizes = [4, 64], strides = [1, 1]} : vector<4x1024xf32> to vector<4x64xf32>
    %c56 = arith.constant 56 : index
    %c0_20 = arith.constant 0 : index
    %35 = vector.load %arg6[%c56, %c0_20] : memref<64x64xf32, #tpu.memory_space<vmem>>, vector<4x64xf32>
    tpu.vector_store %arg6[%c56, %c0_20], %34 {strides = array<i32>} : memref<64x64xf32, #tpu.memory_space<vmem>>, vector<4x64xf32>,
    %36 = vector.extract_strided_slice %5 {offsets = [0, 960], sizes = [4, 64], strides = [1, 1]} : vector<4x1024xf32> to vector<4x64xf32>
    %c60 = arith.constant 60 : index
    %c0_21 = arith.constant 0 : index
    %37 = vector.load %arg6[%c60, %c0_21] : memref<64x64xf32, #tpu.memory_space<vmem>>, vector<4x64xf32>
    tpu.vector_store %arg6[%c60, %c0_21], %36 {strides = array<i32>} : memref<64x64xf32, #tpu.memory_space<vmem>>, vector<4x64xf32>,
    %c0_22 = arith.constant 0 : index
    %c0_23 = arith.constant 0 : index
    %38 = vector.load %arg6[%c0_22, %c0_23] : memref<64x64xf32, #tpu.memory_space<vmem>>, vector<64x64xf32>
    %c0_24 = arith.constant 0 : index
    %c0_25 = arith.constant 0 : index
    %39 = vector.load %arg3[%c0_24, %c0_25] : memref<64x144xf32, #tpu.memory_space<vmem>>, vector<64x144xf32>
    %cst_26 = arith.constant dense<0.000000e+00> : vector<64x144xf32>
    %40 = tpu.matmul %38, %39, %cst_26 {dimension_numbers = #tpu.dot_dimension_numbers<[1], [0], [0], [1], [0, 0, 1, 1], [], []>} : vector<64x64xf32>, vector<64x144xf32>, vector<64x144xf32> -> vector<64x144xf32>
    %c0_27 = arith.constant 0 : index
    %c0_28 = arith.constant 0 : index
    %41 = vector.load %arg4[%c0_27, %c0_28] : memref<1x144xf32, #tpu.memory_space<vmem>>, vector<1x144xf32>
    %42 = vector.broadcast %41 : vector<1x144xf32> to vector<64x144xf32>
    %43 = arith.addf %40, %42 : vector<64x144xf32>
    %c0_29 = arith.constant 0 : index
    %c0_30 = arith.constant 0 : index
    %44 = vector.load %arg5[%c0_29, %c0_30] : memref<64x144xf32, #tpu.memory_space<vmem>>, vector<64x144xf32>
    tpu.vector_store %arg5[%c0_29, %c0_30], %43 {strides = array<i32>} : memref<64x144xf32, #tpu.memory_space<vmem>>, vector<64x144xf32>,
    return
  }
}

</mosaic_0001>

<llo_original>
// kernel: embedding_forward.1
$region0: #{embedding_forward.1}
  #allocation0 [shape = 'u32[]', space=smem, size = 0x4, offset = 0x4, fixed_abs, tag = 'smem constant byte address 0x4 - core index']
  #allocation1 [shape = 'u32[144,128]{1,0:T(1,128)}', space=vmem, size = 0x12000, scoped, tag = 'internal scratch']
  #allocation2 [shape = 'f32[64,64]{1,0:T(8,128)}', space=vmem, size = 0x8000, scoped, tag = 'scratch operand']
  %s0 = inlined_call_operand.vmem [shape: f32[4,64], index: 0, kind: input, shape index: {}]
  %s1 = inlined_call_operand.hbm [shape: f32[64,1024], index: 1, kind: input, shape index: {}]
  %s2 = inlined_call_operand.vmem [shape: f32[1,1024], index: 2, kind: input, shape index: {}]
  %s3 = inlined_call_operand.hbm [shape: f32[64,144], index: 3, kind: input, shape index: {}]
  %s4 = inlined_call_operand.vmem [shape: f32[1,144], index: 4, kind: input, shape index: {}]
  %s5 = inlined_call_operand.vmem [shape: f32[64,144], index: 5, kind: output, shape index: {}]
  %s6 = sld [smem:[#allocation0]]
  $region38: #{embedding_forward.1} parent=0
    _
  %s8 = ssub.s32 1, %s6
  %s9 = scalar_select 0, %s8, %s6
  $region1: #{embedding_forward.1} parent=0
    #allocation3 [shape = 'u8[262144]{0}', space=vmem, size = 0x40000, scoped, tag = 'input window, operand 1, single buffered']
    #allocation4 [shape = 's32[1]{0}', space=sflag, size = 0x4, scoped, tag = 'scoped memory for embedding_forward.1']
    #allocation5 [shape = 'u8[65536]{0}', space=vmem, size = 0x10000, scoped, tag = 'input window, operand 3, single buffered']
    #allocation6 [shape = 's32[1]{0}', space=sflag, size = 0x4, scoped, tag = 'scoped memory for embedding_forward.1']
    %10 = vsyncpa [#allocation4], 0
    %11 = vsyncpa [#allocation6], 0
    // Predicated region
    $region2: #{embedding_forward.1} parent=1 // pred_check
      _
    $region3: #{embedding_forward.1} parent=1 // pred_check_branch
      %13 = sbr.rel (0) target = $region5
    $region4: #{embedding_forward.1} parent=1 // pred_region
      _
    $region5: #{embedding_forward.1} parent=1 // pred_fallthru
      _
    // Predicated region
    $region6: #{embedding_forward.1} parent=1 // pred_check
      _
    $region7: #{embedding_forward.1} parent=1 // pred_check_branch
      %15 = sbr.rel (0) target = $region9
    $region8: #{embedding_forward.1} parent=1 // pred_region
      %s17 = ssub.s32 8192, 8192
      %18 = vsyncadd [#allocation4], %s17
      %s19 = sshll.u32 [#allocation3], 4
      %s20 = int_to_ptr.vmem [resolvable:$true] %s19
      %25 = dma.hbm_to_vmem [thread:$0]  %s1, 8192, %s20, [#allocation4], 1024, 1024, 64
    $region9: #{embedding_forward.1} parent=1 // pred_fallthru
      _
    // Predicated region
    $region10: #{embedding_forward.1} parent=1 // pred_check
      _
    $region11: #{embedding_forward.1} parent=1 // pred_check_branch
      %27 = sbr.rel (0) target = $region13
    $region12: #{embedding_forward.1} parent=1 // pred_region
      _
    $region13: #{embedding_forward.1} parent=1 // pred_fallthru
      _
    // Predicated region
    $region14: #{embedding_forward.1} parent=1 // pred_check
      _
    $region15: #{embedding_forward.1} parent=1 // pred_check_branch
      %29 = sbr.rel (0) target = $region17
    $region16: #{embedding_forward.1} parent=1 // pred_region
      %s31 = ssub.s32 2048, 2048
      %32 = vsyncadd [#allocation6], %s31
      %s33 = sshll.u32 [#allocation5], 4
      %s34 = int_to_ptr.vmem [resolvable:$true] %s33
      %39 = dma.hbm_to_vmem [thread:$0]  %s3, 2048, %s34, [#allocation6], 256, 256, 16
    $region17: #{embedding_forward.1} parent=1 // pred_fallthru
      _
    // Predicated region
    $region18: #{embedding_forward.1} parent=1 // pred_check
      _
    $region19: #{embedding_forward.1} parent=1 // pred_check_branch
      %41 = sbr.rel (0) target = $region21
    $region20: #{embedding_forward.1} parent=1 // pred_region
      _
    $region21: #{embedding_forward.1} parent=1 // pred_fallthru
      _
    // Predicated region
    $region22: #{embedding_forward.1} parent=1 // pred_check
      _
    $region23: #{embedding_forward.1} parent=1 // pred_check_branch
      %43 = sbr.rel (0) target = $region25
    $region24: #{embedding_forward.1} parent=1 // pred_region
      %44 = dma.done [#allocation4], 8192
    $region25: #{embedding_forward.1} parent=1 // pred_fallthru
      _
    // Predicated region
    $region26: #{embedding_forward.1} parent=1 // pred_check
      _
    $region27: #{embedding_forward.1} parent=1 // pred_check_branch
      %46 = sbr.rel (0) target = $region29
    $region28: #{embedding_forward.1} parent=1 // pred_region
      %47 = dma.done [#allocation6], 2048
    $region29: #{embedding_forward.1} parent=1 // pred_fallthru
      _
    %v48 = vld [vmem:[%s0] sm:$0xf]
    %v49 = vld [vmem:[#allocation3] sm:$0xff]
    %v50 = vld [vmem:[#allocation3 + $0x8] sm:$0xff]
    %v51 = vld [vmem:[#allocation3 + $0x10] sm:$0xff]
    %v52 = vld [vmem:[#allocation3 + $0x18] sm:$0xff]
    %v53 = vld [vmem:[#allocation3 + $0x20] sm:$0xff]
    %v54 = vld [vmem:[#allocation3 + $0x28] sm:$0xff]
    %v55 = vld [vmem:[#allocation3 + $0x30] sm:$0xff]
    %v56 = vld [vmem:[#allocation3 + $0x38] sm:$0xff]
    %v57 = vld [vmem:[#allocation3 + $0x40] sm:$0xff]
    %v58 = vld [vmem:[#allocation3 + $0x48] sm:$0xff]
    %v59 = vld [vmem:[#allocation3 + $0x50] sm:$0xff]
    %v60 = vld [vmem:[#allocation3 + $0x58] sm:$0xff]
    %v61 = vld [vmem:[#allocation3 + $0x60] sm:$0xff]
    %v62 = vld [vmem:[#allocation3 + $0x68] sm:$0xff]
    %v63 = vld [vmem:[#allocation3 + $0x70] sm:$0xff]
    %v64 = vld [vmem:[#allocation3 + $0x78] sm:$0xff]
    %v65 = vld [vmem:[#allocation3 + $0x80] sm:$0xff]
    %v66 = vld [vmem:[#allocation3 + $0x88] sm:$0xff]
    %v67 = vld [vmem:[#allocation3 + $0x90] sm:$0xff]
    %v68 = vld [vmem:[#allocation3 + $0x98] sm:$0xff]
    %v69 = vld [vmem:[#allocation3 + $0xa0] sm:$0xff]
    %v70 = vld [vmem:[#allocation3 + $0xa8] sm:$0xff]
    %v71 = vld [vmem:[#allocation3 + $0xb0] sm:$0xff]
    %v72 = vld [vmem:[#allocation3 + $0xb8] sm:$0xff]
    %v73 = vld [vmem:[#allocation3 + $0xc0] sm:$0xff]
    %v74 = vld [vmem:[#allocation3 + $0xc8] sm:$0xff]
    %v75 = vld [vmem:[#allocation3 + $0xd0] sm:$0xff]
    %v76 = vld [vmem:[#allocation3 + $0xd8] sm:$0xff]
    %v77 = vld [vmem:[#allocation3 + $0xe0] sm:$0xff]
    %v78 = vld [vmem:[#allocation3 + $0xe8] sm:$0xff]
    %v79 = vld [vmem:[#allocation3 + $0xf0] sm:$0xff]
    %v80 = vld [vmem:[#allocation3 + $0xf8] sm:$0xff]
    %v81 = vld [vmem:[#allocation3 + $0x100] sm:$0xff]
    %v82 = vld [vmem:[#allocation3 + $0x108] sm:$0xff]
    %v83 = vld [vmem:[#allocation3 + $0x110] sm:$0xff]
    %v84 = vld [vmem:[#allocation3 + $0x118] sm:$0xff]
    %v85 = vld [vmem:[#allocation3 + $0x120] sm:$0xff]
    %v86 = vld [vmem:[#allocation3 + $0x128] sm:$0xff]
    %v87 = vld [vmem:[#allocation3 + $0x130] sm:$0xff]
    %v88 = vld [vmem:[#allocation3 + $0x138] sm:$0xff]
    %v89 = vld [vmem:[#allocation3 + $0x140] sm:$0xff]
    %v90 = vld [vmem:[#allocation3 + $0x148] sm:$0xff]
    %v91 = vld [vmem:[#allocation3 + $0x150] sm:$0xff]
    %v92 = vld [vmem:[#allocation3 + $0x158] sm:$0xff]
    %v93 = vld [vmem:[#allocation3 + $0x160] sm:$0xff]
    %v94 = vld [vmem:[#allocation3 + $0x168] sm:$0xff]
    %v95 = vld [vmem:[#allocation3 + $0x170] sm:$0xff]
    %v96 = vld [vmem:[#allocation3 + $0x178] sm:$0xff]
    %v97 = vld [vmem:[#allocation3 + $0x180] sm:$0xff]
    %v98 = vld [vmem:[#allocation3 + $0x188] sm:$0xff]
    %v99 = vld [vmem:[#allocation3 + $0x190] sm:$0xff]
    %v100 = vld [vmem:[#allocation3 + $0x198] sm:$0xff]
    %v101 = vld [vmem:[#allocation3 + $0x1a0] sm:$0xff]
    %v102 = vld [vmem:[#allocation3 + $0x1a8] sm:$0xff]
    %v103 = vld [vmem:[#allocation3 + $0x1b0] sm:$0xff]
    %v104 = vld [vmem:[#allocation3 + $0x1b8] sm:$0xff]
    %v105 = vld [vmem:[#allocation3 + $0x1c0] sm:$0xff]
    %v106 = vld [vmem:[#allocation3 + $0x1c8] sm:$0xff]
    %v107 = vld [vmem:[#allocation3 + $0x1d0] sm:$0xff]
    %v108 = vld [vmem:[#allocation3 + $0x1d8] sm:$0xff]
    %v109 = vld [vmem:[#allocation3 + $0x1e0] sm:$0xff]
    %v110 = vld [vmem:[#allocation3 + $0x1e8] sm:$0xff]
    %v111 = vld [vmem:[#allocation3 + $0x1f0] sm:$0xff]
    %v112 = vld [vmem:[#allocation3 + $0x1f8] sm:$0xff]
    %v113 = vld [vmem:[%s2] sm:$0xff]
    %v115 = vlaneseq
    %v116 = vshrl.u32 %v115, 7
    %v117 = vsub.s32 0, %v116
    %v118 = vrot.slane %v113, %v117
    %v119 = vlaneseq
    %v120 = vshrl.u32 %v119, 7
    %v121 = vsub.s32 1, %v120
    %v122 = vrot.slane %v113, %v121
    %v123 = vlaneseq
    %v124 = vshrl.u32 %v123, 7
    %v125 = vsub.s32 2, %v124
    %v126 = vrot.slane %v113, %v125
    %v127 = vlaneseq
    %v128 = vshrl.u32 %v127, 7
    %v129 = vsub.s32 3, %v128
    %v130 = vrot.slane %v113, %v129
    %v131 = vlaneseq
    %v132 = vshrl.u32 %v131, 7
    %v133 = vsub.s32 4, %v132
    %v134 = vrot.slane %v113, %v133
    %v135 = vlaneseq
    %v136 = vshrl.u32 %v135, 7
    %v137 = vsub.s32 5, %v136
    %v138 = vrot.slane %v113, %v137
    %v139 = vlaneseq
    %v140 = vshrl.u32 %v139, 7
    %v141 = vsub.s32 6, %v140
    %v142 = vrot.slane %v113, %v141
    %v143 = vlaneseq
    %v144 = vshrl.u32 %v143, 7
    %v145 = vsub.s32 7, %v144
    %v146 = vrot.slane %v113, %v145
    %vm155 = vcmask 523264
    %v157 = vsel %vm155, %v48, 0
    %159 = vmatprep.subr.mxu0 %v50
    %160 = vmatpush1.msra.mxu0 %v49
    %161 = vmatprep.subr.mxu0 %v58
    %162 = vmatpush1.msra.mxu0 %v57
    %163 = vmatprep.subr.mxu0 %v66
    %164 = vmatpush1.msra.mxu0 %v65
    %165 = vmatprep.subr.mxu0 %v74
    %166 = vmatpush1.msra.mxu0 %v73
    %167 = vmatprep.subr.mxu0 %v82
    %168 = vmatpush1.msra.mxu0 %v81
    %169 = vmatprep.subr.mxu0 %v90
    %170 = vmatpush1.msra.mxu0 %v89
    %171 = vmatprep.subr.mxu0 %v98
    %172 = vmatpush1.msra.mxu0 %v97
    %173 = vmatprep.subr.mxu0 %v106
    %174 = vmatpush1.msra.mxu0 %v105
    %175 = vmatprep.subr.mxu0 0.0
    %176 = vmatpush1.msra.mxu0 0.0
    %177 = vmatprep.subr.mxu0 0.0
    %178 = vmatpush1.msra.mxu0 0.0
    %179 = vmatprep.subr.mxu0 0.0
    %180 = vmatpush1.msra.mxu0 0.0
    %181 = vmatprep.subr.mxu0 0.0
    %182 = vmatpush1.msra.mxu0 0.0
    %183 = vmatprep.subr.mxu0 0.0
    %184 = vmatpush1.msra.mxu0 0.0
    %185 = vmatprep.subr.mxu0 0.0
    %186 = vmatpush1.msra.mxu0 0.0
    %187 = vmatprep.subr.mxu0 0.0
    %188 = vmatpush1.msra.mxu0 0.0
    %189 = vmatprep.subr.mxu0 0.0
    %190 = vmatpush1.msra.mxu0 0.0
    %191 = vmatprep.subr.mxu0 0.0
    %192 = vmatpush1.msra.mxu0 0.0
    %193 = vmatprep.subr.mxu0 0.0
    %194 = vmatpush1.msra.mxu0 0.0
    %195 = vmatprep.subr.mxu0 0.0
    %196 = vmatpush1.msra.mxu0 0.0
    %197 = vmatprep.subr.mxu0 0.0
    %198 = vmatpush1.msra.mxu0 0.0
    %199 = vmatprep.subr.mxu0 0.0
    %200 = vmatpush1.msra.mxu0 0.0
    %201 = vmatprep.subr.mxu0 0.0
    %202 = vmatpush1.msra.mxu0 0.0
    %203 = vmatprep.subr.mxu0 0.0
    %204 = vmatpush1.msra.mxu0 0.0
    %205 = vmatprep.subr.mxu0 0.0
    %206 = vmatpush1.msra.mxu0 0.0
    %207 = vmatprep.subr.mxu0 0.0
    %208 = vmatpush1.msra.mxu0 0.0
    %209 = vmatprep.subr.mxu0 0.0
    %210 = vmatpush1.msra.mxu0 0.0
    %211 = vmatprep.subr.mxu0 0.0
    %212 = vmatpush1.msra.mxu0 0.0
    %213 = vmatprep.subr.mxu0 0.0
    %214 = vmatpush1.msra.mxu0 0.0
    %215 = vmatprep.subr.mxu0 0.0
    %216 = vmatpush1.msra.mxu0 0.0
    %217 = vmatprep.subr.mxu0 0.0
    %218 = vmatpush1.msra.mxu0 0.0
    %219 = vmatprep.subr.mxu0 0.0
    %220 = vmatpush1.msra.mxu0 0.0
    %221 = vmatprep.subr.mxu0 0.0
    %222 = vmatpush1.msra.mxu0 0.0
    %223 = vmatprep.mubr.f32.mxu0 0.0
    %224 = vmatmul.mubr.f32.gmra.mrb[0].mxu0 %v157
    %v225 = vpop.f32.mrb[0].mxu0
    %v226 = vadd.f32 %v118, %v225
    %v227 = vpop.f32.mrb[0].mxu0
    %v228 = vadd.f32 %v122, %v227
    %229 = vdwg.mxu0
    %230 = vmatprep.subr.mxu0 %v52
    %231 = vmatpush1.msra.mxu0 %v51
    %232 = vmatprep.subr.mxu0 %v60
    %233 = vmatpush1.msra.mxu0 %v59
    %234 = vmatprep.subr.mxu0 %v68
    %235 = vmatpush1.msra.mxu0 %v67
    %236 = vmatprep.subr.mxu0 %v76
    %237 = vmatpush1.msra.mxu0 %v75
    %238 = vmatprep.subr.mxu0 %v84
    %239 = vmatpush1.msra.mxu0 %v83
    %240 = vmatprep.subr.mxu0 %v92
    %241 = vmatpush1.msra.mxu0 %v91
    %242 = vmatprep.subr.mxu0 %v100
    %243 = vmatpush1.msra.mxu0 %v99
    %244 = vmatprep.subr.mxu0 %v108
    %245 = vmatpush1.msra.mxu0 %v107
    %246 = vmatprep.subr.mxu0 0.0
    %247 = vmatpush1.msra.mxu0 0.0
    %248 = vmatprep.subr.mxu0 0.0
    %249 = vmatpush1.msra.mxu0 0.0
    %250 = vmatprep.subr.mxu0 0.0
    %251 = vmatpush1.msra.mxu0 0.0
    %252 = vmatprep.subr.mxu0 0.0
    %253 = vmatpush1.msra.mxu0 0.0
    %254 = vmatprep.subr.mxu0 0.0
    %255 = vmatpush1.msra.mxu0 0.0
    %256 = vmatprep.subr.mxu0 0.0
    %257 = vmatpush1.msra.mxu0 0.0
    %258 = vmatprep.subr.mxu0 0.0
    %259 = vmatpush1.msra.mxu0 0.0
    %260 = vmatprep.subr.mxu0 0.0
    %261 = vmatpush1.msra.mxu0 0.0
    %262 = vmatprep.subr.mxu0 0.0
    %263 = vmatpush1.msra.mxu0 0.0
    %264 = vmatprep.subr.mxu0 0.0
    %265 = vmatpush1.msra.mxu0 0.0
    %266 = vmatprep.subr.mxu0 0.0
    %267 = vmatpush1.msra.mxu0 0.0
    %268 = vmatprep.subr.mxu0 0.0
    %269 = vmatpush1.msra.mxu0 0.0
    %270 = vmatprep.subr.mxu0 0.0
    %271 = vmatpush1.msra.mxu0 0.0
    %272 = vmatprep.subr.mxu0 0.0
    %273 = vmatpush1.msra.mxu0 0.0
    %274 = vmatprep.subr.mxu0 0.0
    %275 = vmatpush1.msra.mxu0 0.0
    %276 = vmatprep.subr.mxu0 0.0
    %277 = vmatpush1.msra.mxu0 0.0
    %278 = vmatprep.subr.mxu0 0.0
    %279 = vmatpush1.msra.mxu0 0.0
    %280 = vmatprep.subr.mxu0 0.0
    %281 = vmatpush1.msra.mxu0 0.0
    %282 = vmatprep.subr.mxu0 0.0
    %283 = vmatpush1.msra.mxu0 0.0
    %284 = vmatprep.subr.mxu0 0.0
    %285 = vmatpush1.msra.mxu0 0.0
    %286 = vmatprep.subr.mxu0 0.0
    %287 = vmatpush1.msra.mxu0 0.0
    %288 = vmatprep.subr.mxu0 0.0
    %289 = vmatpush1.msra.mxu0 0.0
    %290 = vmatprep.subr.mxu0 0.0
    %291 = vmatpush1.msra.mxu0 0.0
    %292 = vmatprep.subr.mxu0 0.0
    %293 = vmatpush1.msra.mxu0 0.0
    %294 = vmatprep.mubr.f32.mxu0 0.0
    %295 = vmatmul.mubr.f32.gmra.mrb[0].mxu0 %v157
    %v296 = vpop.f32.mrb[0].mxu0
    %v297 = vadd.f32 %v126, %v296
    %v298 = vpop.f32.mrb[0].mxu0
    %v299 = vadd.f32 %v130, %v298
    %300 = vdwg.mxu0
    %301 = vmatprep.subr.mxu0 %v54
    %302 = vmatpush1.msra.mxu0 %v53
    %303 = vmatprep.subr.mxu0 %v62
    %304 = vmatpush1.msra.mxu0 %v61
    %305 = vmatprep.subr.mxu0 %v70
    %306 = vmatpush1.msra.mxu0 %v69
    %307 = vmatprep.subr.mxu0 %v78
    %308 = vmatpush1.msra.mxu0 %v77
    %309 = vmatprep.subr.mxu0 %v86
    %310 = vmatpush1.msra.mxu0 %v85
    %311 = vmatprep.subr.mxu0 %v94
    %312 = vmatpush1.msra.mxu0 %v93
    %313 = vmatprep.subr.mxu0 %v102
    %314 = vmatpush1.msra.mxu0 %v101
    %315 = vmatprep.subr.mxu0 %v110
    %316 = vmatpush1.msra.mxu0 %v109
    %317 = vmatprep.subr.mxu0 0.0
    %318 = vmatpush1.msra.mxu0 0.0
    %319 = vmatprep.subr.mxu0 0.0
    %320 = vmatpush1.msra.mxu0 0.0
    %321 = vmatprep.subr.mxu0 0.0
    %322 = vmatpush1.msra.mxu0 0.0
    %323 = vmatprep.subr.mxu0 0.0
    %324 = vmatpush1.msra.mxu0 0.0
    %325 = vmatprep.subr.mxu0 0.0
    %326 = vmatpush1.msra.mxu0 0.0
    %327 = vmatprep.subr.mxu0 0.0
    %328 = vmatpush1.msra.mxu0 0.0
    %329 = vmatprep.subr.mxu0 0.0
    %330 = vmatpush1.msra.mxu0 0.0
    %331 = vmatprep.subr.mxu0 0.0
    %332 = vmatpush1.msra.mxu0 0.0
    %333 = vmatprep.subr.mxu0 0.0
    %334 = vmatpush1.msra.mxu0 0.0
    %335 = vmatprep.subr.mxu0 0.0
    %336 = vmatpush1.msra.mxu0 0.0
    %337 = vmatprep.subr.mxu0 0.0
    %338 = vmatpush1.msra.mxu0 0.0
    %339 = vmatprep.subr.mxu0 0.0
    %340 = vmatpush1.msra.mxu0 0.0
    %341 = vmatprep.subr.mxu0 0.0
    %342 = vmatpush1.msra.mxu0 0.0
    %343 = vmatprep.subr.mxu0 0.0
    %344 = vmatpush1.msra.mxu0 0.0
    %345 = vmatprep.subr.mxu0 0.0
    %346 = vmatpush1.msra.mxu0 0.0
    %347 = vmatprep.subr.mxu0 0.0
    %348 = vmatpush1.msra.mxu0 0.0
    %349 = vmatprep.subr.mxu0 0.0
    %350 = vmatpush1.msra.mxu0 0.0
    %351 = vmatprep.subr.mxu0 0.0
    %352 = vmatpush1.msra.mxu0 0.0
    %353 = vmatprep.subr.mxu0 0.0
    %354 = vmatpush1.msra.mxu0 0.0
    %355 = vmatprep.subr.mxu0 0.0
    %356 = vmatpush1.msra.mxu0 0.0
    %357 = vmatprep.subr.mxu0 0.0
    %358 = vmatpush1.msra.mxu0 0.0
    %359 = vmatprep.subr.mxu0 0.0
    %360 = vmatpush1.msra.mxu0 0.0
    %361 = vmatprep.subr.mxu0 0.0
    %362 = vmatpush1.msra.mxu0 0.0
    %363 = vmatprep.subr.mxu0 0.0
    %364 = vmatpush1.msra.mxu0 0.0
    %365 = vmatprep.mubr.f32.mxu0 0.0
    %366 = vmatmul.mubr.f32.gmra.mrb[0].mxu0 %v157
    %v367 = vpop.f32.mrb[0].mxu0
    %v368 = vadd.f32 %v134, %v367
    %v369 = vpop.f32.mrb[0].mxu0
    %v370 = vadd.f32 %v138, %v369
    %371 = vdwg.mxu0
    %372 = vmatprep.subr.mxu0 %v56
    %373 = vmatpush1.msra.mxu0 %v55
    %374 = vmatprep.subr.mxu0 %v64
    %375 = vmatpush1.msra.mxu0 %v63
    %376 = vmatprep.subr.mxu0 %v72
    %377 = vmatpush1.msra.mxu0 %v71
    %378 = vmatprep.subr.mxu0 %v80
    %379 = vmatpush1.msra.mxu0 %v79
    %380 = vmatprep.subr.mxu0 %v88
    %381 = vmatpush1.msra.mxu0 %v87
    %382 = vmatprep.subr.mxu0 %v96
    %383 = vmatpush1.msra.mxu0 %v95
    %384 = vmatprep.subr.mxu0 %v104
    %385 = vmatpush1.msra.mxu0 %v103
    %386 = vmatprep.subr.mxu0 %v112
    %387 = vmatpush1.msra.mxu0 %v111
    %388 = vmatprep.subr.mxu0 0.0
    %389 = vmatpush1.msra.mxu0 0.0
    %390 = vmatprep.subr.mxu0 0.0
    %391 = vmatpush1.msra.mxu0 0.0
    %392 = vmatprep.subr.mxu0 0.0
    %393 = vmatpush1.msra.mxu0 0.0
    %394 = vmatprep.subr.mxu0 0.0
    %395 = vmatpush1.msra.mxu0 0.0
    %396 = vmatprep.subr.mxu0 0.0
    %397 = vmatpush1.msra.mxu0 0.0
    %398 = vmatprep.subr.mxu0 0.0
    %399 = vmatpush1.msra.mxu0 0.0
    %400 = vmatprep.subr.mxu0 0.0
    %401 = vmatpush1.msra.mxu0 0.0
    %402 = vmatprep.subr.mxu0 0.0
    %403 = vmatpush1.msra.mxu0 0.0
    %404 = vmatprep.subr.mxu0 0.0
    %405 = vmatpush1.msra.mxu0 0.0
    %406 = vmatprep.subr.mxu0 0.0
    %407 = vmatpush1.msra.mxu0 0.0
    %408 = vmatprep.subr.mxu0 0.0
    %409 = vmatpush1.msra.mxu0 0.0
    %410 = vmatprep.subr.mxu0 0.0
    %411 = vmatpush1.msra.mxu0 0.0
    %412 = vmatprep.subr.mxu0 0.0
    %413 = vmatpush1.msra.mxu0 0.0
    %414 = vmatprep.subr.mxu0 0.0
    %415 = vmatpush1.msra.mxu0 0.0
    %416 = vmatprep.subr.mxu0 0.0
    %417 = vmatpush1.msra.mxu0 0.0
    %418 = vmatprep.subr.mxu0 0.0
    %419 = vmatpush1.msra.mxu0 0.0
    %420 = vmatprep.subr.mxu0 0.0
    %421 = vmatpush1.msra.mxu0 0.0
    %422 = vmatprep.subr.mxu0 0.0
    %423 = vmatpush1.msra.mxu0 0.0
    %424 = vmatprep.subr.mxu0 0.0
    %425 = vmatpush1.msra.mxu0 0.0
    %426 = vmatprep.subr.mxu0 0.0
    %427 = vmatpush1.msra.mxu0 0.0
    %428 = vmatprep.subr.mxu0 0.0
    %429 = vmatpush1.msra.mxu0 0.0
    %430 = vmatprep.subr.mxu0 0.0
    %431 = vmatpush1.msra.mxu0 0.0
    %432 = vmatprep.subr.mxu0 0.0
    %433 = vmatpush1.msra.mxu0 0.0
    %434 = vmatprep.subr.mxu0 0.0
    %435 = vmatpush1.msra.mxu0 0.0
    %436 = vmatprep.mubr.f32.mxu0 0.0
    %437 = vmatmul.mubr.f32.gmra.mrb[0].mxu0 %v157
    %v438 = vpop.f32.mrb[0].mxu0
    %v439 = vadd.f32 %v142, %v438
    %v440 = vpop.f32.mrb[0].mxu0
    %v441 = vadd.f32 %v146, %v440
    %442 = vdwg.mxu0
    %vm443 = vcmask 519168
    %444 = vst.msk [vmem:[#allocation2] sm:$0xf] %vm443, %v226
    %446 = vrot.lane.b32.xlu0 %v226, 64
    %v447 = vpop.permute.xlu0 %446
    %449 = vst.msk [vmem:[#allocation2 + $0x4] sm:$0xf] %vm443, %v447
    %450 = vst.msk [vmem:[#allocation2 + $0x8] sm:$0xf] %vm443, %v228
    %452 = vrot.lane.b32.xlu0 %v228, 64
    %v453 = vpop.permute.xlu0 %452
    %455 = vst.msk [vmem:[#allocation2 + $0xc] sm:$0xf] %vm443, %v453
    %456 = vst.msk [vmem:[#allocation2 + $0x10] sm:$0xf] %vm443, %v297
    %458 = vrot.lane.b32.xlu0 %v297, 64
    %v459 = vpop.permute.xlu0 %458
    %461 = vst.msk [vmem:[#allocation2 + $0x14] sm:$0xf] %vm443, %v459
    %462 = vst.msk [vmem:[#allocation2 + $0x18] sm:$0xf] %vm443, %v299
    %464 = vrot.lane.b32.xlu0 %v299, 64
    %v465 = vpop.permute.xlu0 %464
    %467 = vst.msk [vmem:[#allocation2 + $0x1c] sm:$0xf] %vm443, %v465
    %468 = vst.msk [vmem:[#allocation2 + $0x20] sm:$0xf] %vm443, %v368
    %470 = vrot.lane.b32.xlu0 %v368, 64
    %v471 = vpop.permute.xlu0 %470
    %473 = vst.msk [vmem:[#allocation2 + $0x24] sm:$0xf] %vm443, %v471
    %474 = vst.msk [vmem:[#allocation2 + $0x28] sm:$0xf] %vm443, %v370
    %476 = vrot.lane.b32.xlu0 %v370, 64
    %v477 = vpop.permute.xlu0 %476
    %479 = vst.msk [vmem:[#allocation2 + $0x2c] sm:$0xf] %vm443, %v477
    %480 = vst.msk [vmem:[#allocation2 + $0x30] sm:$0xf] %vm443, %v439
    %482 = vrot.lane.b32.xlu0 %v439, 64
    %v483 = vpop.permute.xlu0 %482
    %485 = vst.msk [vmem:[#allocation2 + $0x34] sm:$0xf] %vm443, %v483
    %486 = vst.msk [vmem:[#allocation2 + $0x38] sm:$0xf] %vm443, %v441
    %488 = vrot.lane.b32.xlu0 %v441, 64
    %v489 = vpop.permute.xlu0 %488
    %491 = vst.msk [vmem:[#allocation2 + $0x3c] sm:$0xf] %vm443, %v489
    %v492 = vld [vmem:[#allocation2] sm:$0xff]
    %v493 = vld [vmem:[#allocation2 + $0x8] sm:$0xff]
    %v494 = vld [vmem:[#allocation2 + $0x10] sm:$0xff]
    %v495 = vld [vmem:[#allocation2 + $0x18] sm:$0xff]
    %v496 = vld [vmem:[#allocation2 + $0x20] sm:$0xff]
    %v497 = vld [vmem:[#allocation2 + $0x28] sm:$0xff]
    %v498 = vld [vmem:[#allocation2 + $0x30] sm:$0xff]
    %v499 = vld [vmem:[#allocation2 + $0x38] sm:$0xff]
    %v500 = vld [vmem:[#allocation5] sm:$0xff]
    %v501 = vld [vmem:[#allocation5 + $0x8] sm:$0xff]
    %v502 = vld [vmem:[#allocation5 + $0x10] sm:$0xff]
    %v503 = vld [vmem:[#allocation5 + $0x18] sm:$0xff]
    %v504 = vld [vmem:[#allocation5 + $0x20] sm:$0xff]
    %v505 = vld [vmem:[#allocation5 + $0x28] sm:$0xff]
    %v506 = vld [vmem:[#allocation5 + $0x30] sm:$0xff]
    %v507 = vld [vmem:[#allocation5 + $0x38] sm:$0xff]
    %v508 = vld [vmem:[#allocation5 + $0x40] sm:$0xff]
    %v509 = vld [vmem:[#allocation5 + $0x48] sm:$0xff]
    %v510 = vld [vmem:[#allocation5 + $0x50] sm:$0xff]
    %v511 = vld [vmem:[#allocation5 + $0x58] sm:$0xff]
    %v512 = vld [vmem:[#allocation5 + $0x60] sm:$0xff]
    %v513 = vld [vmem:[#allocation5 + $0x68] sm:$0xff]
    %v514 = vld [vmem:[#allocation5 + $0x70] sm:$0xff]
    %v515 = vld [vmem:[#allocation5 + $0x78] sm:$0xff]
    %v516 = vld [vmem:[%s4] sm:$0x3]
    %v518 = vlaneseq
    %v519 = vshrl.u32 %v518, 7
    %v520 = vsub.s32 0, %v519
    %v521 = vrot.slane %v516, %v520
    %v522 = vlaneseq
    %v523 = vshrl.u32 %v522, 7
    %v524 = vsub.s32 1, %v523
    %v525 = vrot.slane %v516, %v524
    %v529 = vsel %vm155, %v492, 0
    %v532 = vsel %vm155, %v493, 0
    %v535 = vsel %vm155, %v494, 0
    %v538 = vsel %vm155, %v495, 0
    %v541 = vsel %vm155, %v496, 0
    %v544 = vsel %vm155, %v497, 0
    %v547 = vsel %vm155, %v498, 0
    %v550 = vsel %vm155, %v499, 0
    %552 = vmatprep.subr.mxu0 %v501
    %553 = vmatpush1.msra.mxu0 %v500
    %554 = vmatprep.subr.mxu0 %v503
    %555 = vmatpush1.msra.mxu0 %v502
    %556 = vmatprep.subr.mxu0 %v505
    %557 = vmatpush1.msra.mxu0 %v504
    %558 = vmatprep.subr.mxu0 %v507
    %559 = vmatpush1.msra.mxu0 %v506
    %560 = vmatprep.subr.mxu0 %v509
    %561 = vmatpush1.msra.mxu0 %v508
    %562 = vmatprep.subr.mxu0 %v511
    %563 = vmatpush1.msra.mxu0 %v510
    %564 = vmatprep.subr.mxu0 %v513
    %565 = vmatpush1.msra.mxu0 %v512
    %566 = vmatprep.subr.mxu0 %v515
    %567 = vmatpush1.msra.mxu0 %v514
    %568 = vmatprep.subr.mxu0 0.0
    %569 = vmatpush1.msra.mxu0 0.0
    %570 = vmatprep.subr.mxu0 0.0
    %571 = vmatpush1.msra.mxu0 0.0
    %572 = vmatprep.subr.mxu0 0.0
    %573 = vmatpush1.msra.mxu0 0.0
    %574 = vmatprep.subr.mxu0 0.0
    %575 = vmatpush1.msra.mxu0 0.0
    %576 = vmatprep.subr.mxu0 0.0
    %577 = vmatpush1.msra.mxu0 0.0
    %578 = vmatprep.subr.mxu0 0.0
    %579 = vmatpush1.msra.mxu0 0.0
    %580 = vmatprep.subr.mxu0 0.0
    %581 = vmatpush1.msra.mxu0 0.0
    %582 = vmatprep.subr.mxu0 0.0
    %583 = vmatpush1.msra.mxu0 0.0
    %584 = vmatprep.subr.mxu0 0.0
    %585 = vmatpush1.msra.mxu0 0.0
    %586 = vmatprep.subr.mxu0 0.0
    %587 = vmatpush1.msra.mxu0 0.0
    %588 = vmatprep.subr.mxu0 0.0
    %589 = vmatpush1.msra.mxu0 0.0
    %590 = vmatprep.subr.mxu0 0.0
    %591 = vmatpush1.msra.mxu0 0.0
    %592 = vmatprep.subr.mxu0 0.0
    %593 = vmatpush1.msra.mxu0 0.0
    %594 = vmatprep.subr.mxu0 0.0
    %595 = vmatpush1.msra.mxu0 0.0
    %596 = vmatprep.subr.mxu0 0.0
    %597 = vmatpush1.msra.mxu0 0.0
    %598 = vmatprep.subr.mxu0 0.0
    %599 = vmatpush1.msra.mxu0 0.0
    %600 = vmatprep.subr.mxu0 0.0
    %601 = vmatpush1.msra.mxu0 0.0
    %602 = vmatprep.subr.mxu0 0.0
    %603 = vmatpush1.msra.mxu0 0.0
    %604 = vmatprep.subr.mxu0 0.0
    %605 = vmatpush1.msra.mxu0 0.0
    %606 = vmatprep.subr.mxu0 0.0
    %607 = vmatpush1.msra.mxu0 0.0
    %608 = vmatprep.subr.mxu0 0.0
    %609 = vmatpush1.msra.mxu0 0.0
    %610 = vmatprep.subr.mxu0 0.0
    %611 = vmatpush1.msra.mxu0 0.0
    %612 = vmatprep.subr.mxu0 0.0
    %613 = vmatpush1.msra.mxu0 0.0
    %614 = vmatprep.subr.mxu0 0.0
    %615 = vmatpush1.msra.mxu0 0.0
    %616 = vmatprep.mubr.f32.mxu0 0.0
    %617 = vmatmul.mubr.f32.gmra.mrb[0].mxu0 %v529
    %v618 = vpop.f32.mrb[0].mxu0
    %v619 = vadd.f32 %v521, %v618
    %v620 = vpop.f32.mrb[0].mxu0
    %v621 = vadd.f32 %v525, %v620
    %622 = vmatprep.mubr.f32.mxu0 0.0
    %623 = vmatmul.mubr.f32.gmra.mrb[0].mxu0 %v532
    %v624 = vpop.f32.mrb[0].mxu0
    %v625 = vadd.f32 %v521, %v624
    %v626 = vpop.f32.mrb[0].mxu0
    %v627 = vadd.f32 %v525, %v626
    %628 = vmatprep.mubr.f32.mxu0 0.0
    %629 = vmatmul.mubr.f32.gmra.mrb[0].mxu0 %v535
    %v630 = vpop.f32.mrb[0].mxu0
    %v631 = vadd.f32 %v521, %v630
    %v632 = vpop.f32.mrb[0].mxu0
    %v633 = vadd.f32 %v525, %v632
    %634 = vmatprep.mubr.f32.mxu0 0.0
    %635 = vmatmul.mubr.f32.gmra.mrb[0].mxu0 %v538
    %v636 = vpop.f32.mrb[0].mxu0
    %v637 = vadd.f32 %v521, %v636
    %v638 = vpop.f32.mrb[0].mxu0
    %v639 = vadd.f32 %v525, %v638
    %640 = vmatprep.mubr.f32.mxu0 0.0
    %641 = vmatmul.mubr.f32.gmra.mrb[0].mxu0 %v541
    %v642 = vpop.f32.mrb[0].mxu0
    %v643 = vadd.f32 %v521, %v642
    %v644 = vpop.f32.mrb[0].mxu0
    %v645 = vadd.f32 %v525, %v644
    %646 = vmatprep.mubr.f32.mxu0 0.0
    %647 = vmatmul.mubr.f32.gmra.mrb[0].mxu0 %v544
    %v648 = vpop.f32.mrb[0].mxu0
    %v649 = vadd.f32 %v521, %v648
    %v650 = vpop.f32.mrb[0].mxu0
    %v651 = vadd.f32 %v525, %v650
    %652 = vmatprep.mubr.f32.mxu0 0.0
    %653 = vmatmul.mubr.f32.gmra.mrb[0].mxu0 %v547
    %v654 = vpop.f32.mrb[0].mxu0
    %v655 = vadd.f32 %v521, %v654
    %v656 = vpop.f32.mrb[0].mxu0
    %v657 = vadd.f32 %v525, %v656
    %658 = vmatprep.mubr.f32.mxu0 0.0
    %659 = vmatmul.mubr.f32.gmra.mrb[0].mxu0 %v550
    %v660 = vpop.f32.mrb[0].mxu0
    %v661 = vadd.f32 %v521, %v660
    %v662 = vpop.f32.mrb[0].mxu0
    %v663 = vadd.f32 %v525, %v662
    %664 = vdwg.mxu0
    %665 = vst [vmem:[%s5] sm:$0xff] %v619
    %vm666 = vcmask 130048
    %667 = vst.msk [vmem:[%s5 + $0x8] sm:$0xff] %vm666, %v621
    %668 = vst [vmem:[%s5 + $0x10] sm:$0xff] %v625
    %669 = vst.msk [vmem:[%s5 + $0x18] sm:$0xff] %vm666, %v627
    %670 = vst [vmem:[%s5 + $0x20] sm:$0xff] %v631
    %671 = vst.msk [vmem:[%s5 + $0x28] sm:$0xff] %vm666, %v633
    %672 = vst [vmem:[%s5 + $0x30] sm:$0xff] %v637
    %673 = vst.msk [vmem:[%s5 + $0x38] sm:$0xff] %vm666, %v639
    %674 = vst [vmem:[%s5 + $0x40] sm:$0xff] %v643
    %675 = vst.msk [vmem:[%s5 + $0x48] sm:$0xff] %vm666, %v645
    %676 = vst [vmem:[%s5 + $0x50] sm:$0xff] %v649
    %677 = vst.msk [vmem:[%s5 + $0x58] sm:$0xff] %vm666, %v651
    %678 = vst [vmem:[%s5 + $0x60] sm:$0xff] %v655
    %679 = vst.msk [vmem:[%s5 + $0x68] sm:$0xff] %vm666, %v657
    %680 = vst [vmem:[%s5 + $0x70] sm:$0xff] %v661
    %681 = vst.msk [vmem:[%s5 + $0x78] sm:$0xff] %vm666, %v663
    // Predicated region
    $region30: #{embedding_forward.1} parent=1 // pred_check
      _
    $region31: #{embedding_forward.1} parent=1 // pred_check_branch
      %683 = sbr.rel (0) target = $region33
    $region32: #{embedding_forward.1} parent=1 // pred_region
      _
    $region33: #{embedding_forward.1} parent=1 // pred_fallthru
      _
    // Predicated region
    $region34: #{embedding_forward.1} parent=1 // pred_check
      _
    $region35: #{embedding_forward.1} parent=1 // pred_check_branch
      %685 = sbr.rel (0) target = $region37
    $region36: #{embedding_forward.1} parent=1 // pred_region
      _
    $region37: #{embedding_forward.1} parent=1 // pred_fallthru
      _
    %686 = vsyncpa [#allocation4], 1
    %687 = vsyncpa [#allocation6], 1

</llo_original>
